<compile_context>
chip_gen: v7x
topology: tpu7x:2x2x1
jax: 0.10.0
libtpu: 0.0.40
codegen_flags: <defaults>
</compile_context>

<pallas_src>
import functools

import jax
import jax.numpy as jnp
from jax.experimental import pallas as pl
from jax.experimental.pallas import tpu as pltpu


def _round_up(x, m):
    return ((x + m - 1) // m) * m


# ---------------------------------------------------------------------------
# Kernel 1: pixel normalization   out = img * (1/std) - mean*(1/std)
#   img_ref : (tr, L) block of the (N*C, R, L) view, any dtype (uint8/f32/bf16)
#   inv_std_ref / mean_scaled_ref : (C,) f32 in SMEM, indexed by the channel
#   derived from the flattened (N*C) grid axis.
# ---------------------------------------------------------------------------
def _normalize_kernel(img_ref, inv_std_ref, mean_scaled_ref, out_ref, *,
                      num_channels):
    c = pl.program_id(0) % num_channels
    s = inv_std_ref[c]
    m = mean_scaled_ref[c]
    x = img_ref[...].astype(jnp.float32)
    out_ref[...] = (x * s - m).astype(out_ref.dtype)


def normalize_images(images_nchw, pixel_mean, pixel_std, *,
                     out_dtype=jnp.float32, tile_rows=2048):
    """(x - pixel_mean) / pixel_std, per channel.

    Accepts uint8 (the raw detectron2 image tensor) or float input; the cast
    happens inside the kernel.  `out_dtype=jnp.bfloat16` halves writeback bytes
    when the downstream backbone consumes bf16 (kept f32 here for parity).
    """
    N, C, H, W = images_nchw.shape
    hw = H * W

    # SMEM per-channel constants; divide rewritten as multiply by 1/std.
    inv_std = (1.0 / pixel_std.astype(jnp.float32)).reshape(C)
    mean_scaled = pixel_mean.astype(jnp.float32).reshape(C) * inv_std

    if hw % 128 == 0:
        # lane-dense fast path: free reshape, 128-wide lanes
        R, L = hw // 128, 128
    else:
        # general path: keep (H, W); W is the (full-extent) lane dim
        R, L = H, W
    x = images_nchw.reshape(N * C, R, L)

    # big row tiles (multiple of 8, or the full extent); partial last tile OK
    tr = R if tile_rows >= R else max(8, (tile_rows // 8) * 8)
    tr = min(tr, R)
    grid = (N * C, pl.cdiv(R, tr))

    kernel = functools.partial(_normalize_kernel, num_channels=C)
    out = pl.pallas_call(
        kernel,
        out_shape=jax.ShapeDtypeStruct((N * C, R, L), out_dtype),
        grid=grid,
        in_specs=[
            pl.BlockSpec((None, tr, L), lambda i, t: (i, t, 0)),
            pl.BlockSpec(memory_space=pltpu.MemorySpace.SMEM),
            pl.BlockSpec(memory_space=pltpu.MemorySpace.SMEM),
        ],
        out_specs=pl.BlockSpec((None, tr, L), lambda i, t: (i, t, 0)),
        compiler_params=pltpu.CompilerParams(
            dimension_semantics=("parallel", "parallel"),
            vmem_limit_bytes=32 * 1024 * 1024,
        ),
    )(x, inv_std, mean_scaled)

    return out.reshape(N, C, H, W)


# ---------------------------------------------------------------------------
# Kernel 2: CLIP-text x LVIS similarity + softmax + objectness/IoU compose
#   tf   : (tq, D)  per-query CLIP text features (un-normalized, f32)
#   lvis : (D, Vp)  pre-normalized LVIS table, zero-padded to Vp, pre-cast to
#                   the dot dtype (bf16 by default) in the wrapper
#   base : (tq, 1)  sigmoid(objectness) * sigmoid(iou), pre-multiplied
#   mask : (1, Vp)  additive mask row: 0 for valid columns, -1e30 for padding
#   out[q, v] = base[q] * softmax_v(100 * <tf[q]/||tf[q]||, lvis[:, v]>)
# ---------------------------------------------------------------------------
def _score_kernel(tf_ref, lvis_ref, base_ref, mask_ref, out_ref):
    tf = tf_ref[...]                                              # (tq, D) f32
    lv = lvis_ref[...]                                            # (D, Vp)
    # row normalization via rsqrt (EUP), 100x temperature folded in
    inv_norm = jax.lax.rsqrt(jnp.sum(tf * tf, axis=1, keepdims=True) + 1e-12)
    tf_s = (tf * (100.0 * inv_norm)).astype(lv.dtype)
    sim = jnp.dot(tf_s, lv, preferred_element_type=jnp.float32)   # (tq, Vp)
    sim = sim + mask_ref[...]                                     # mask padding
    m = jnp.max(sim, axis=-1, keepdims=True)
    e = jnp.exp(sim - m)
    inv_denom = pl.reciprocal(jnp.sum(e, axis=-1, keepdims=True), approx=True)
    out_ref[...] = ((base_ref[...] * inv_denom) * e).astype(out_ref.dtype)


# ---------------------------------------------------------------------------
# Inference wrapper (tensor math of DDETRSVLUni.inference with mask_on=False,
# score_thres=0, max_num_inst <= 300, use_custom_pred=False).
# Returns (scores, boxes_xyxy, labels, topk_boxes); topk_boxes is the per-slot
# query index (used by the module to reorder pred_object_descriptions).
# ---------------------------------------------------------------------------
def ddetrs_vl_uni_inference(pred_logits, pred_boxious, pred_boxes,
                            text_features, lvis_embed, image_sizes,
                            topk_for_mapping, *, q_tile=256, dot_in_bf16=True):
    B, Q, D = text_features.shape
    _, V = lvis_embed.shape
    K = topk_for_mapping

    # One-time LVIS table normalization + pad + cast, hoisted out of the kernel
    # (matches the module: lvis_embed is pre-normalized in __init__).
    lv = lvis_embed.astype(jnp.float32)
    lv = lv / jnp.sqrt(jnp.sum(lv * lv, axis=0, keepdims=True) + 1e-12)
    v_pad = _round_up(V, 128)
    if v_pad != V:
        lv = jnp.pad(lv, ((0, 0), (0, v_pad - V)))
    if dot_in_bf16:
        lv = lv.astype(jnp.bfloat16)   # resident table stays bf16 in VMEM

    # additive padding mask row (0 valid, -1e30 padded columns)
    mask_row = jnp.where(jnp.arange(v_pad) < V, 0.0, -1e30
                         ).astype(jnp.float32).reshape(1, v_pad)

    # Q tiling (256 matches v6e/v7x MXU rows; use q_tile=128 on v5e)
    q8 = _round_up(Q, 8)
    tq = max(8, (min(q_tile, q8) // 8) * 8)
    q_pad = _round_up(q8, tq)

    tf = text_features.astype(jnp.float32)
    base = (jax.nn.sigmoid(pred_logits[..., 0:1].astype(jnp.float32))
            * jax.nn.sigmoid(pred_boxious.astype(jnp.float32)))     # (B, Q, 1)
    if q_pad != Q:
        pad = ((0, 0), (0, q_pad - Q), (0, 0))
        tf = jnp.pad(tf, pad)
        base = jnp.pad(base, pad)            # zero base -> zero padded scores

    scored_p = pl.pallas_call(
        _score_kernel,
        out_shape=jax.ShapeDtypeStruct((B, q_pad, v_pad), jnp.float32),
        grid=(B, q_pad // tq),                # >= 2 programs for v7x megacore
        in_specs=[
            pl.BlockSpec((None, tq, D), lambda b, q: (b, q, 0)),
            pl.BlockSpec((D, v_pad), lambda b, q: (0, 0)),      # resident table
            pl.BlockSpec((None, tq, 1), lambda b, q: (b, q, 0)),
            pl.BlockSpec((1, v_pad), lambda b, q: (0, 0)),      # resident mask
        ],
        out_specs=pl.BlockSpec((None, tq, v_pad), lambda b, q: (b, q, 0)),
        compiler_params=pltpu.CompilerParams(
            dimension_semantics=("parallel", "parallel"),
            vmem_limit_bytes=32 * 1024 * 1024,
        ),
    )(tf, lv, base, mask_row)
    scored = scored_p[:, :Q, :V]              # drop padded queries / columns

    # similarity.topk(K) per query (values already scaled by compose_prob; the
    # per-row scale is positive so indices equal torch's sim_indices).
    sim_vals, sim_idx = jax.lax.top_k(scored, K)                   # (B, Q, K)
    compose_flat = sim_vals.reshape(B, Q * K)
    sim_idx_flat = sim_idx.reshape(B, Q * K)

    # torch.topk(compose_prob.view(-1), numel) == full descending sort
    topk_values, topk_indexes = jax.lax.top_k(compose_flat, Q * K)
    topk_boxes = topk_indexes // K
    labels = jnp.take_along_axis(sim_idx_flat, topk_indexes, axis=1)

    # box decode (cxcywh -> xyxy, scale by (w, h, w, h)) -- plain JAX.
    bx = jnp.take_along_axis(pred_boxes, topk_boxes[..., None], axis=1)
    cx, cy, bw, bh = bx[..., 0], bx[..., 1], bx[..., 2], bx[..., 3]
    xyxy = jnp.stack([cx - 0.5 * bw, cy - 0.5 * bh,
                      cx + 0.5 * bw, cy + 0.5 * bh], axis=-1)
    h = image_sizes[:, 0][:, None]
    w = image_sizes[:, 1][:, None]
    boxes_xyxy = xyxy * jnp.stack([w, h, w, h], axis=-1)

    return topk_values, boxes_xyxy, labels, topk_boxes


# ---------------------------------------------------------------------------
# Pure-JAX reference, written in the torch formulation (correctness check only)
# ---------------------------------------------------------------------------
def _reference(pred_logits, pred_boxious, pred_boxes, text_features,
               lvis_embed, image_sizes, K, *, dot_in_bf16=False):
    B, Q, _ = pred_logits.shape
    tf = text_features / jnp.linalg.norm(text_features, axis=-1, keepdims=True)
    lv = lvis_embed / jnp.linalg.norm(lvis_embed, axis=0, keepdims=True)
    if dot_in_bf16:
        logits = jnp.einsum("bqd,dv->bqv", (100.0 * tf).astype(jnp.bfloat16),
                            lv.astype(jnp.bfloat16),
                            preferred_element_type=jnp.float32)
    else:
        logits = 100.0 * jnp.einsum("bqd,dv->bqv", tf, lv,
                                    precision=jax.lax.Precision.HIGHEST)
    sim = jax.nn.softmax(logits, axis=-1)
    base = jax.nn.sigmoid(pred_logits[..., 0:1]) * jax.nn.sigmoid(pred_boxious)
    scored = base * sim
    sim_vals, sim_idx = jax.lax.top_k(scored, K)
    topk_values, topk_indexes = jax.lax.top_k(sim_vals.reshape(B, Q * K), Q * K)
    topk_boxes = topk_indexes // K
    labels = jnp.take_along_axis(sim_idx.reshape(B, Q * K), topk_indexes, axis=1)
    bx = jnp.take_along_axis(pred_boxes, topk_boxes[..., None], axis=1)
    cx, cy, bw, bh = bx[..., 0], bx[..., 1], bx[..., 2], bx[..., 3]
    xyxy = jnp.stack([cx - bw / 2, cy - bh / 2, cx + bw / 2, cy + bh / 2], axis=-1)
    h = image_sizes[:, 0][:, None]
    w = image_sizes[:, 1][:, None]
    return topk_values, xyxy * jnp.stack([w, h, w, h], axis=-1), labels, topk_boxes


if __name__ == "__main__":
    key = jax.random.PRNGKey(0)
    ks = jax.random.split(key, 8)

    pixel_mean = jnp.array([123.675, 116.28, 103.53], jnp.float32)
    pixel_std = jnp.array([58.395, 57.12, 57.375], jnp.float32)

    # ---- normalize: lane-dense fast path, uint8 input (H*W % 128 == 0) -----
    N, C, H, W = 2, 3, 64, 64
    images_u8 = jax.random.randint(ks[0], (N, C, H, W), 0, 256,
                                   dtype=jnp.int32).astype(jnp.uint8)
    norm_u8 = normalize_images(images_u8, pixel_mean, pixel_std)
    ref_u8 = ((images_u8.astype(jnp.float32) - pixel_mean.reshape(1, C, 1, 1))
              / pixel_std.reshape(1, C, 1, 1))
    assert jnp.allclose(norm_u8, ref_u8, atol=1e-4, rtol=1e-4)

    # ---- normalize: general path (H*W % 128 != 0), f32 input, partial tile -
    N2, H2, W2 = 1, 20, 24
    images_f32 = jax.random.uniform(ks[1], (N2, C, H2, W2), jnp.float32) * 255.0
    norm_f32 = normalize_images(images_f32, pixel_mean, pixel_std, tile_rows=8)
    ref_f32 = ((images_f32 - pixel_mean.reshape(1, C, 1, 1))
               / pixel_std.reshape(1, C, 1, 1))
    assert jnp.allclose(norm_f32, ref_f32, atol=1e-4, rtol=1e-4)

    # ---- inference post-processing -----------------------------------------
    # Q not a multiple of 8 and V not a multiple of 128 on purpose: exercises
    # the Q padding and the additive vocab-padding mask.
    B, Q, D, V, K = 2, 12, 32, 200, 4
    pred_logits = jax.random.normal(ks[2], (B, Q, 1), jnp.float32)
    pred_boxious = jax.random.normal(ks[3], (B, Q, 1), jnp.float32)
    pred_boxes = jax.nn.sigmoid(jax.random.normal(ks[4], (B, Q, 4), jnp.float32))
    text_features = jax.random.normal(ks[5], (B, Q, D), jnp.float32)
    lvis_embed = jax.random.normal(ks[6], (D, V), jnp.float32)
    image_sizes = jnp.array([[64.0, 64.0]] * B, jnp.float32)   # (h, w) per image

    # f32-dot path: strict parity check against the torch-formulated reference
    scores, boxes_xyxy, labels, topk_boxes = ddetrs_vl_uni_inference(
        pred_logits, pred_boxious, pred_boxes, text_features, lvis_embed,
        image_sizes, topk_for_mapping=K, dot_in_bf16=False)
    r_scores, r_boxes, r_labels, r_topk_boxes = _reference(
        pred_logits, pred_boxious, pred_boxes, text_features, lvis_embed,
        image_sizes, K, dot_in_bf16=False)

    assert jnp.allclose(scores, r_scores, rtol=2e-2, atol=1e-6)
    assert bool(jnp.all(scores[:, :-1] >= scores[:, 1:] - 1e-6))
    # selection: multiset of (query, class) pairs matches exactly (robust to
    # reorderings among near-equal composed scores in the global sort)
    pair = topk_boxes * V + labels
    r_pair = r_topk_boxes * V + r_labels
    assert jnp.array_equal(jnp.sort(pair, axis=1), jnp.sort(r_pair, axis=1))
    # boxes: decode/scale math checked against the kernel's own selection order
    bx = jnp.take_along_axis(pred_boxes, topk_boxes[..., None], axis=1)
    cx, cy, bw, bh = bx[..., 0], bx[..., 1], bx[..., 2], bx[..., 3]
    exp_boxes = jnp.stack([cx - bw / 2, cy - bh / 2, cx + bw / 2, cy + bh / 2],
                          axis=-1)
    hh = image_sizes[:, 0][:, None]
    ww = image_sizes[:, 1][:, None]
    exp_boxes = exp_boxes * jnp.stack([ww, hh, ww, hh], axis=-1)
    assert jnp.allclose(boxes_xyxy, exp_boxes, atol=1e-5, rtol=1e-5)

    # default bf16-dot path (production config): looser value check against a
    # reference that quantizes the same operands; ordering near exact ties may
    # legitimately differ, so only values + sortedness are asserted.
    scores_bf, boxes_bf, labels_bf, topk_boxes_bf = ddetrs_vl_uni_inference(
        pred_logits, pred_boxious, pred_boxes, text_features, lvis_embed,
        image_sizes, topk_for_mapping=K)          # dot_in_bf16=True default
    rb_scores, _, _, _ = _reference(
        pred_logits, pred_boxious, pred_boxes, text_features, lvis_embed,
        image_sizes, K, dot_in_bf16=True)
    assert jnp.allclose(scores_bf, rb_scores, rtol=5e-2, atol=1e-5)
    assert bool(jnp.all(scores_bf[:, :-1] >= scores_bf[:, 1:] - 1e-6))

    jax.block_until_ready((norm_u8, norm_f32, scores, boxes_xyxy, labels,
                           topk_boxes, scores_bf, boxes_bf))
    print("KERNEL_OK")
</pallas_src>

<mosaic_0001>
module attributes {stable_mosaic.version = 11 : i64} {
  func.func @_normalize_kernel(%arg0: i32, %arg1: i32, %arg2: memref<1x32x128xi8, #tpu.memory_space<vmem>>, %arg3: memref<3xf32, #tpu.memory_space<smem>>, %arg4: memref<3xf32, #tpu.memory_space<smem>>, %arg5: memref<1x32x128xf32, #tpu.memory_space<vmem>>) attributes {dimension_semantics = [#tpu.dimension_semantics<parallel>, #tpu.dimension_semantics<parallel>], iteration_bounds = array<i64: 6, 1>, scalar_prefetch = 0 : i64, scratch_operands = 0 : i64, tpu.core_type = #tpu.core_type<tc>, window_params = [{transform_indices = @transform_0, window_bounds = array<i64: 1, 32, 128>}, {transform_indices = @transform_1, window_bounds = array<i64: 3>}, {transform_indices = @transform_2, window_bounds = array<i64: 3>}, {transform_indices = @transform_3, window_bounds = array<i64: 1, 32, 128>}]} {
    %c3_i32 = arith.constant 3 : i32
    %c0_i32 = arith.constant 0 : i32
    %0 = arith.cmpi eq, %c3_i32, %c0_i32 : i32
    %c1_i32 = arith.constant 1 : i32
    %1 = arith.select %0, %c1_i32, %c3_i32 : i32
    %2 = arith.remsi %arg0, %1 : i32
    %c0_i32_0 = arith.constant 0 : i32
    %3 = arith.cmpi ne, %2, %c0_i32_0 : i32
    %c0_i32_1 = arith.constant 0 : i32
    %4 = arith.cmpi slt, %2, %c0_i32_1 : i32
    %c0_i32_2 = arith.constant 0 : i32
    %5 = arith.cmpi slt, %1, %c0_i32_2 : i32
    %6 = arith.xori %4, %5 : i1
    %7 = arith.andi %6, %3 : i1
    %8 = arith.addi %2, %1 : i32
    %9 = arith.select %7, %8, %2 : i32
    %10 = arith.index_cast %9 : i32 to index
    %11 = memref.load %arg3[%10] : memref<3xf32, #tpu.memory_space<smem>>
    %12 = arith.index_cast %9 : i32 to index
    %13 = memref.load %arg4[%12] : memref<3xf32, #tpu.memory_space<smem>>
    %c0 = arith.constant 0 : index
    %c0_3 = arith.constant 0 : index
    %c0_4 = arith.constant 0 : index
    %14 = vector.load %arg2[%c0, %c0_3, %c0_4] : memref<1x32x128xi8, #tpu.memory_space<vmem>>, vector<1x32x128xi8>
    %15 = vector.shape_cast %14 : vector<1x32x128xi8> to vector<32x128xi8>
    %16 = arith.uitofp %15 : vector<32x128xi8> to vector<32x128xf32>
    %17 = vector.broadcast %11 : f32 to vector<32x128xf32>
    %18 = arith.mulf %16, %17 : vector<32x128xf32>
    %19 = vector.broadcast %13 : f32 to vector<32x128xf32>
    %20 = arith.subf %18, %19 : vector<32x128xf32>
    %c0_5 = arith.constant 0 : index
    %c0_6 = arith.constant 0 : index
    %c0_7 = arith.constant 0 : index
    %21 = vector.load %arg5[%c0_5, %c0_6, %c0_7] : memref<1x32x128xf32, #tpu.memory_space<vmem>>, vector<1x32x128xf32>
    %22 = vector.shape_cast %21 : vector<1x32x128xf32> to vector<32x128xf32>
    %23 = vector.shape_cast %20 : vector<32x128xf32> to vector<1x32x128xf32>
    tpu.vector_store %arg5[%c0_5, %c0_6, %c0_7], %23 {strides = array<i32>} : memref<1x32x128xf32, #tpu.memory_space<vmem>>, vector<1x32x128xf32>,
    return
  }
  func.func @transform_0(%arg0: i32, %arg1: i32) -> (i32, i32, i32) {
    %c0_i32 = arith.constant 0 : i32
    %c0_i32_0 = arith.constant 0 : i32
    return %arg0, %arg1, %c0_i32 : i32, i32, i32
  }
  func.func @transform_1(%arg0: i32, %arg1: i32) -> i32 {
    %c0_i32 = arith.constant 0 : i32
    %c0_i32_0 = arith.constant 0 : i32
    return %c0_i32 : i32
  }
  func.func @transform_2(%arg0: i32, %arg1: i32) -> i32 {
    %c0_i32 = arith.constant 0 : i32
    %c0_i32_0 = arith.constant 0 : i32
    return %c0_i32 : i32
  }
  func.func @transform_3(%arg0: i32, %arg1: i32) -> (i32, i32, i32) {
    %c0_i32 = arith.constant 0 : i32
    %c0_i32_0 = arith.constant 0 : i32
    return %arg0, %arg1, %c0_i32 : i32, i32, i32
  }
}

</mosaic_0001>

<llo_original>
// kernel: tpu_custom_call.1
$region0: #{tpu_custom_call.1}
  #allocation0 [shape = 'u32[]', space=smem, size = 0x4, offset = 0x4, fixed_abs, tag = 'smem constant byte address 0x4 - core index']
  #allocation1 [shape = 'u32[144,128]{1,0:T(1,128)}', space=vmem, size = 0x12000, scoped, tag = 'internal scratch']
  %s0 = inlined_call_operand.hbm [shape: u8[6,32,128], index: 0, kind: input, shape index: {}]
  %s1 = inlined_call_operand.vmem [shape: f32[3], index: 1, kind: input, shape index: {}]
  %s2 = inlined_call_operand.vmem [shape: f32[3], index: 2, kind: input, shape index: {}]
  %s3 = inlined_call_operand.hbm [shape: f32[6,32,128], index: 3, kind: output, shape index: {}]
  %s4 = sld [smem:[#allocation0]]
  $region57: #{tpu_custom_call.1} parent=0
    _
  %s6 = ssub.s32 1, %s4
  %s7 = scalar_select 0, %s6, %s4
  $region1: #{tpu_custom_call.1} parent=0
    #allocation2 [shape = 'u8[8192]{0}', space=vmem, size = 0x2000, scoped, tag = 'input window, operand 0']
    #allocation3 [shape = 's32[2]{0}', space=sflag, size = 0x8, scoped, tag = 'scoped memory for tpu_custom_call.1']
    #allocation4 [shape = 's32[2]{0}', space=sflag, size = 0x8, scoped, tag = 'scoped memory for tpu_custom_call.1']
    #allocation5 [shape = 's32[2]{0}', space=sflag, size = 0x8, scoped, tag = 'scoped memory for tpu_custom_call.1']
    #allocation6 [shape = 'u8[512]{0}', space=smem, size = 0x200, scoped, tag = 'input window, operand 1, single buffered']
    #allocation7 [shape = 'u8[512]{0}', space=smem, size = 0x200, scoped, tag = 'input window, operand 2, single buffered']
    #allocation8 [shape = 's32[1]{0}', space=sflag, size = 0x4, scoped, tag = 'scoped memory for tpu_custom_call.1']
    #allocation9 [shape = 'u8[32768]{0}', space=vmem, size = 0x8000, scoped, tag = 'output window, operand 0']
    %8 = vsyncpa [#allocation3], 0
    %s9 = scalar_lea.sflag [#allocation3], 1
    %10 = vsyncpa %s9, 0
    %11 = vsyncpa [#allocation5], 0
    %12 = vsyncpa [#allocation8], 0
    %13 = vsyncpa [#allocation4], 0
    %s14 = scalar_lea.sflag [#allocation4], 1
    %15 = vsyncpa %s14, 0
    loop: start=0, step=1, limit=8
    $region2: #{tpu_custom_call.1} parent=1 // loop_pre_header
      _
    $region3: #{tpu_custom_call.1} parent=1 // loop_header
      %s17 = sphi 0, %s21
      %p18 = scmp.ge.s32.totalorder %s17, 8
      %s24 = sphi 0, %s36
      %s25 = sphi 0, %s32
      %s26 = sphi 0, %s24
      %s27 = sphi 0, %s25
      %s28 = sphi 0, %s26
      %s29 = sphi 0, %s27
      %s41 = sphi 0, %s43
      %s44 = sphi 0, %s41
      %s45 = sphi 0, %s44
      %s61 = sphi 0, %s45
      %s65 = sphi 0, %s65
      %s67 = sphi 0, %s65
      %s68 = sphi 0, %s67
      %s82 = sphi 0, %s68
      %s86 = sphi 0, %s86
      %s88 = sphi 0, %s86
      %s89 = sphi 0, %s88
      %s103 = sphi 0, %s89
      %s111 = sphi 0, %s113
      %s114 = sphi 0, %s111
      %s115 = sphi 0, %s114
      %s131 = sphi 0, %s115
    $region4: #{tpu_custom_call.1} parent=1 // loop_header_branch
      %20 = sbr.rel (%p18) target = $region8
    $region5: #{tpu_custom_call.1} parent=1 // loop_body
      %s22 = ssub.s32 %s17, 1
      %s23 = ssub.s32 %s17, 2
      %s30 = sadd.s32 1, %s25
      %p31 = scmp.ge.s32.totalorder %s30, 1
      %s32 = scalar_select %p31, 0, %s30
      %s33 = sadd.s32 1, %s24
      %s34 = scalar_select %p31, %s33, %s24
      %p35 = scmp.ge.s32.totalorder %s34, 6
      %s36 = scalar_select %p35, 0, %s34
      %s37 = ssub.s32 %s24, %s36
      %s38 = ssub.s32 %s25, %s32
      %s39 = sor.u32 %s37, %s38
      %p40 = scmp.eq.s32.totalorder %s39, 0
      %s42 = sadd.s32 %s41, 1
      %s43 = scalar_select %p40, %s41, %s42
      %p46 = pneg %p40
      %p47 = scmp.eq.s32.totalorder %s17, 5
      %p48 = por %p46, %p47
      %p49 = scmp.ne.s32.totalorder %s41, %s44
      %p50 = scmp.eq.s32.totalorder %s17, 0
      %p51 = por %p49, %p50
      %p52 = scmp.ne.s32.totalorder %s41, %s44
      %p53 = scmp.eq.s32.totalorder %s22, 5
      %p54 = por %p52, %p53
      %p55 = scmp.ne.s32.totalorder %s44, %s45
      %p56 = scmp.eq.s32.totalorder %s22, 0
      %p57 = por %p55, %p56
      %p58 = scmp.ne.s32.totalorder %s44, %s45
      %p59 = scmp.eq.s32.totalorder %s23, 5
      %p60 = por %p58, %p59
      %p62 = scmp.ne.s32.totalorder %s45, %s61
      %p63 = scmp.eq.s32.totalorder %s23, 0
      %p64 = por %p62, %p63
      %s66 = sadd.s32 %s65, 1
      %p69 = scmp.eq.s32.totalorder %s17, 5
      %p70 = scmp.ne.s32.totalorder %s65, %s67
      %p71 = scmp.eq.s32.totalorder %s17, 0
      %p72 = por %p70, %p71
      %p73 = scmp.ne.s32.totalorder %s65, %s67
      %p74 = scmp.eq.s32.totalorder %s22, 5
      %p75 = por %p73, %p74
      %p76 = scmp.ne.s32.totalorder %s67, %s68
      %p77 = scmp.eq.s32.totalorder %s22, 0
      %p78 = por %p76, %p77
      %p79 = scmp.ne.s32.totalorder %s67, %s68
      %p80 = scmp.eq.s32.totalorder %s23, 5
      %p81 = por %p79, %p80
      %p83 = scmp.ne.s32.totalorder %s68, %s82
      %p84 = scmp.eq.s32.totalorder %s23, 0
      %p85 = por %p83, %p84
      %s87 = sadd.s32 %s86, 1
      %p90 = scmp.eq.s32.totalorder %s17, 5
      %p91 = scmp.ne.s32.totalorder %s86, %s88
      %p92 = scmp.eq.s32.totalorder %s17, 0
      %p93 = por %p91, %p92
      %p94 = scmp.ne.s32.totalorder %s86, %s88
      %p95 = scmp.eq.s32.totalorder %s22, 5
      %p96 = por %p94, %p95
      %p97 = scmp.ne.s32.totalorder %s88, %s89
      %p98 = scmp.eq.s32.totalorder %s22, 0
      %p99 = por %p97, %p98
      %p100 = scmp.ne.s32.totalorder %s88, %s89
      %p101 = scmp.eq.s32.totalorder %s23, 5
      %p102 = por %p100, %p101
      %p104 = scmp.ne.s32.totalorder %s89, %s103
      %p105 = scmp.eq.s32.totalorder %s23, 0
      %p106 = por %p104, %p105
      %s107 = ssub.s32 %s24, %s36
      %s108 = ssub.s32 %s25, %s32
      %s109 = sor.u32 %s107, %s108
      %p110 = scmp.eq.s32.totalorder %s109, 0
      %s112 = sadd.s32 %s111, 1
      %s113 = scalar_select %p110, %s111, %s112
      %p116 = pneg %p110
      %p117 = scmp.eq.s32.totalorder %s17, 5
      %p118 = por %p116, %p117
      %p119 = scmp.ne.s32.totalorder %s111, %s114
      %p120 = scmp.eq.s32.totalorder %s17, 0
      %p121 = por %p119, %p120
      %p122 = scmp.ne.s32.totalorder %s111, %s114
      %p123 = scmp.eq.s32.totalorder %s22, 5
      %p124 = por %p122, %p123
      %p125 = scmp.ne.s32.totalorder %s114, %s115
      %p126 = scmp.eq.s32.totalorder %s22, 0
      %p127 = por %p125, %p126
      %p128 = scmp.ne.s32.totalorder %s114, %s115
      %p129 = scmp.eq.s32.totalorder %s23, 5
      %p130 = por %p128, %p129
      %p132 = scmp.ne.s32.totalorder %s115, %s131
      %p133 = scmp.eq.s32.totalorder %s23, 0
      %p134 = por %p132, %p133
      %p135 = scmp.le.s32.totalorder 1, %s17
      %p136 = scmp.lt.s32.totalorder %s17, 7
      %p137 = pnand %p135, %p136
      %p138 = pneg %p137
      // Predicated region
      $region9: #{tpu_custom_call.1} parent=5 // pred_check
        _
      $region10: #{tpu_custom_call.1} parent=5 // pred_check_branch
        %140 = sbr.rel (%p137) target = $region12
      $region11: #{tpu_custom_call.1} parent=5 // pred_region
        %s141 = ssub.s32 %s17, 1
        // Predicated region
        $region13: #{tpu_custom_call.1} parent=11 // pred_check
          %p142 = pneg %p78
        $region14: #{tpu_custom_call.1} parent=11 // pred_check_branch
          %144 = sbr.rel (%p142) target = $region16
        $region15: #{tpu_custom_call.1} parent=11 // pred_region
          %s146 = ssub.s32 16, 16
          %147 = vsyncadd [#allocation5], %s146
          %s149 = sshll.u32 %s1, 4
          %s150 = int_to_ptr.vmem [resolvable:$true] %s149
          %152 = dma.vmem_to_smem %s150, 16, [#allocation6], [#allocation5]
        $region16: #{tpu_custom_call.1} parent=11 // pred_fallthru
          _
        // Predicated region
        $region17: #{tpu_custom_call.1} parent=11 // pred_check
          %p153 = pneg %p99
        $region18: #{tpu_custom_call.1} parent=11 // pred_check_branch
          %155 = sbr.rel (%p153) target = $region20
        $region19: #{tpu_custom_call.1} parent=11 // pred_region
          %s157 = ssub.s32 16, 16
          %158 = vsyncadd [#allocation8], %s157
          %s160 = sshll.u32 %s2, 4
          %s161 = int_to_ptr.vmem [resolvable:$true] %s160
          %163 = dma.vmem_to_smem %s161, 16, [#allocation7], [#allocation8]
        $region20: #{tpu_custom_call.1} parent=11 // pred_fallthru
          _
      $region12: #{tpu_custom_call.1} parent=5 // pred_fallthru
        _
      %p164 = scmp.lt.s32.totalorder %s17, 6
      // Predicated region
      $region21: #{tpu_custom_call.1} parent=5 // pred_check
        %p165 = pneg %p164
      $region22: #{tpu_custom_call.1} parent=5 // pred_check_branch
        %167 = sbr.rel (%p165) target = $region24
      $region23: #{tpu_custom_call.1} parent=5 // pred_region
        // Predicated region
        $region25: #{tpu_custom_call.1} parent=23 // pred_check
          %p168 = pneg %p51
        $region26: #{tpu_custom_call.1} parent=23 // pred_check_branch
          %170 = sbr.rel (%p168) target = $region28
        $region27: #{tpu_custom_call.1} parent=23 // pred_region
          %s171 = sand.u32 %s41, 1
          %s172 = scalar_lea.sflag [#allocation3], %s171
          %s173 = sand.u32 %s41, 1
          %s174 = smul.addr %s173, 8
          %s175 = scalar_lea.vmem [#allocation2], %s174
          %s177 = ssub.s32 128, 128
          %178 = vsyncadd %s172, %s177
          %s179 = sadd.s32 %s25, %s24
          %s180 = smul.addr %s179, 128
          %s181 = scalar_lea.hbm %s0, %s180
          %s183 = sshll.u32 %s175, 4
          %s184 = int_to_ptr.vmem [resolvable:$true] %s183
          %186 = dma.hbm_to_vmem [thread:$0]  %s181, 128, %s184, %s172
        $region28: #{tpu_custom_call.1} parent=23 // pred_fallthru
          _
      $region24: #{tpu_custom_call.1} parent=5 // pred_fallthru
        _
      %p187 = scmp.le.s32.totalorder 1, %s17
      %p188 = scmp.lt.s32.totalorder %s17, 7
      %p189 = pnand %p187, %p188
      %p190 = pneg %p189
      // Predicated region
      $region29: #{tpu_custom_call.1} parent=5 // pred_check
        _
      $region30: #{tpu_custom_call.1} parent=5 // pred_check_branch
        %192 = sbr.rel (%p189) target = $region32
      $region31: #{tpu_custom_call.1} parent=5 // pred_region
        %s193 = ssub.s32 %s17, 1
        %s194 = sand.u32 %s44, 1
        %s195 = scalar_lea.sflag [#allocation3], %s194
        %s196 = sand.u32 %s44, 1
        %s197 = smul.addr %s196, 8
        %s198 = scalar_lea.vmem [#allocation2], %s197
        // Predicated region
        $region33: #{tpu_custom_call.1} parent=31 // pred_check
          %p199 = pneg %p57
        $region34: #{tpu_custom_call.1} parent=31 // pred_check_branch
          %201 = sbr.rel (%p199) target = $region36
        $region35: #{tpu_custom_call.1} parent=31 // pred_region
          %202 = dma.done %s195, 128
        $region36: #{tpu_custom_call.1} parent=31 // pred_fallthru
          _
        // Predicated region
        $region37: #{tpu_custom_call.1} parent=31 // pred_check
          %p203 = pneg %p78
        $region38: #{tpu_custom_call.1} parent=31 // pred_check_branch
          %205 = sbr.rel (%p203) target = $region40
        $region39: #{tpu_custom_call.1} parent=31 // pred_region
          %206 = dma.done [#allocation5], 16
        $region40: #{tpu_custom_call.1} parent=31 // pred_fallthru
          _
        // Predicated region
        $region41: #{tpu_custom_call.1} parent=31 // pred_check
          %p207 = pneg %p99
        $region42: #{tpu_custom_call.1} parent=31 // pred_check_branch
          %209 = sbr.rel (%p207) target = $region44
        $region43: #{tpu_custom_call.1} parent=31 // pred_region
          %210 = dma.done [#allocation8], 16
        $region44: #{tpu_custom_call.1} parent=31 // pred_fallthru
          _
        %211 = sfence
        %s212 = sand.u32 %s44, 1
        %s213 = scalar_lea.sflag [#allocation3], %s212
        %s214 = sand.u32 %s44, 1
        %s215 = smul.addr %s214, 8
        %s216 = scalar_lea.vmem [#allocation2], %s215
        %p217 = pneg %p57
        %p218 = pneg %p54
        %p219 = pneg %p78
        %p220 = pneg %p75
        %p221 = pneg %p99
        %p222 = pneg %p96
        %p223 = pneg %p127
        %p224 = pneg %p124
        %s225 = sand.u32 %s114, 1
        %s226 = scalar_lea.sflag [#allocation4], %s225
        %s227 = sand.u32 %s114, 1
        %s228 = smul.addr %s227, 32
        %s229 = scalar_lea.vmem [#allocation9], %s228
        %s230 = smul.u32 4, %s27
        %p231 = scmp.lt.s32.totalorder %s26, 0
        %s232 = ssub.s32 0, %s26
        %s233 = scalar_select %p231, %s232, %s26
        %s234 = sdiv.u32.pop %s233, 3
        %s235 = srem.u32.pop %s233, 3
        %s236 = ssub.s32 0, %s235
        %s237 = scalar_select %p231, %s236, %s235
        %p238 = scmp.ne.s32.totalorder %s237, 0
        %p239 = scmp.lt.s32.totalorder %s237, 0
        %p240 = pnand %p239, %p238
        %p241 = pneg %p240
        %s242 = sadd.s32 %s237, 3
        %s243 = scalar_select %p241, %s242, %s237
        %s244 = sld [smem:[#allocation6 + %s243]]
        %s245 = sld [smem:[#allocation7 + %s243]]
        %v246 = vld [vmem:[%s198] sm:$0xff]
        %v247 = vunpack.c.0.s8 %v246
        %v248 = vunpack.c.1.s8 %v246
        %v249 = vunpack.c.2.s8 %v246
        %v250 = vunpack.c.3.s8 %v246
        %v251 = vand.u32 %v247, 255
        %v252 = vand.u32 %v248, 255
        %v253 = vand.u32 %v249, 255
        %v254 = vand.u32 %v250, 255
        %v255 = vcvt.s32.f32 %v251
        %v256 = vcvt.s32.f32 %v252
        %v257 = vcvt.s32.f32 %v253
        %v258 = vcvt.s32.f32 %v254
        %v259 = vstv %s244
        %v260 = vmul.f32 %v255, %v259
        %v261 = vmul.f32 %v256, %v259
        %v262 = vmul.f32 %v257, %v259
        %v263 = vmul.f32 %v258, %v259
        %v264 = vstv %s245
        %v265 = vsub.f32 %v260, %v264
        %v266 = vsub.f32 %v261, %v264
        %v267 = vsub.f32 %v262, %v264
        %v268 = vsub.f32 %v263, %v264
        %269 = vst [vmem:[%s229] sm:$0xff] %v265
        %270 = vst [vmem:[%s229 + $0x8] sm:$0xff] %v266
        %271 = vst [vmem:[%s229 + $0x10] sm:$0xff] %v267
        %272 = vst [vmem:[%s229 + $0x18] sm:$0xff] %v268
        %s273 = sand.u32 %s114, 1
        %s274 = scalar_lea.sflag [#allocation4], %s273
        %s275 = sand.u32 %s114, 1
        %s276 = smul.addr %s275, 32
        %s277 = scalar_lea.vmem [#allocation9], %s276
        // Predicated region
        $region45: #{tpu_custom_call.1} parent=31 // pred_check
          %p278 = pneg %p124
        $region46: #{tpu_custom_call.1} parent=31 // pred_check_branch
          %280 = sbr.rel (%p278) target = $region48
        $region47: #{tpu_custom_call.1} parent=31 // pred_region
          %s281 = smul.u32 4, %s27
          %s283 = ssub.s32 512, 512
          %284 = vsyncadd %s274, %s283
          %s285 = smul.addr %s26, 4
          %s286 = sadd.s32 %s281, %s285
          %s287 = smul.addr %s286, 128
          %s288 = scalar_lea.hbm %s3, %s287
          %s289 = sshll.u32 %s277, 4
          %s290 = int_to_ptr.vmem [resolvable:$true] %s289
          %295 = dma.vmem_to_hbm [thread:$0]  %s290, 512, %s288, %s274, 128, 128, 8
        $region48: #{tpu_custom_call.1} parent=31 // pred_fallthru
          _
      $region32: #{tpu_custom_call.1} parent=5 // pred_fallthru
        _
      %p296 = scmp.le.s32.totalorder 2, %s17
      // Predicated region
      $region49: #{tpu_custom_call.1} parent=5 // pred_check
        %p297 = pneg %p296
      $region50: #{tpu_custom_call.1} parent=5 // pred_check_branch
        %299 = sbr.rel (%p297) target = $region52
      $region51: #{tpu_custom_call.1} parent=5 // pred_region
        %s300 = ssub.s32 %s17, 2
        // Predicated region
        $region53: #{tpu_custom_call.1} parent=51 // pred_check
          %p301 = pneg %p130
        $region54: #{tpu_custom_call.1} parent=51 // pred_check_branch
          %303 = sbr.rel (%p301) target = $region56
        $region55: #{tpu_custom_call.1} parent=51 // pred_region
          %s304 = sand.u32 %s115, 1
          %s305 = scalar_lea.sflag [#allocation4], %s304
          %s306 = sand.u32 %s115, 1
          %s307 = smul.addr %s306, 32
          %s308 = scalar_lea.vmem [#allocation9], %s307
          %309 = dma.done %s305, 512
        $region56: #{tpu_custom_call.1} parent=51 // pred_fallthru
          _
      $region52: #{tpu_custom_call.1} parent=5 // pred_fallthru
        _
    $region6: #{tpu_custom_call.1} parent=1 // loop_footer
      %s21 = sadd.s32 1, %s17
    $region7: #{tpu_custom_call.1} parent=1 // loop_footer_branch
      %16 = sbr.rel target = $region3
    $region8: #{tpu_custom_call.1} parent=1 // loop_exit
      _
    %310 = vsyncpa [#allocation3], 1
    %s311 = scalar_lea.sflag [#allocation3], 1
    %312 = vsyncpa %s311, 1
    %313 = vsyncpa [#allocation4], 1
    %s314 = scalar_lea.sflag [#allocation4], 1
    %315 = vsyncpa %s314, 1
    %316 = vsyncpa [#allocation5], 1
    %s317 = scalar_lea.sflag [#allocation5], 1
    %318 = vsyncpa %s317, 1
    %319 = vsyncpa [#allocation8], 1

</llo_original>
